<compile_context>
chip_gen: v7x
topology: tpu7x:2x2x1
jax: 0.10.0
libtpu: 0.0.40
codegen_flags: <defaults>
</compile_context>

<pallas_src>
from functools import partial

import jax
import jax.numpy as jnp
from jax.experimental import pallas as pl
from jax.experimental.pallas import tpu as pltpu


def _round_up(x, m):
    return (x + m - 1) // m * m


def hw_kernel(x_ref, h_ref, dg_ref, w_ref, b_ref, sum_ref, out_ref, *, s, mu):
    # Fused Xi + Rou branches: one MXU pass + one tanh over (tile_n, s*s + s).
    y = jnp.tanh(
        jnp.dot(x_ref[...], w_ref[...], preferred_element_type=jnp.float32)
        + b_ref[...]
    )
    a = y[:, : s * s]            # tanh(X @ Wxi + bxi)            (tile_n, s*s)
    b = y[:, s * s:]             # tanh(X[:, :ln] @ Wrou + brou)  (tile_n, s)

    # Batched matvec  out1[n, i] = sum_j A_pre[n, i*s+j] * H[n, j]  on the MXU:
    #   h_rep[n, i*s+j] = H[n, j]  (lane tile, no MXU);  sum_ref[k, i] = (k//s == i).
    h_rep = jnp.tile(h_ref[...], (1, s))                           # (tile_n, s*s)
    out1 = jnp.dot(a * h_rep, sum_ref[...],
                   preferred_element_type=jnp.float32)             # (tile_n, s)

    # Per-row scale mu / s / dg applied AFTER the reduction (s lanes per row).
    scale = (mu / s) * pl.reciprocal(dg_ref[...], approx=False)    # (tile_n, 1)
    out_ref[...] = (out1 * scale + b).astype(out_ref.dtype)


def hw_forward(X, H, dg_list, params, *, ln, s, mu=0.9, tile_n=1024):
    """Pallas wrapper. X: (N, 2*ln) f32, H: (N, s) f32, dg_list: (N,) f32."""
    N = X.shape[0]
    wxi, bxi, wrou, brou = params

    X = X.astype(jnp.float32)
    H = H.astype(jnp.float32)
    dg = dg_list.reshape(N).astype(jnp.float32)

    # Fused parameters: W_comb = [Wxi | pad(Wrou)], b_comb = [bxi | brou].
    wrou_pad = jnp.concatenate(
        [wrou.astype(jnp.float32), jnp.zeros((ln, s), jnp.float32)], axis=0)   # (2*ln, s)
    w_comb = jnp.concatenate([wxi.astype(jnp.float32), wrou_pad], axis=1)      # (2*ln, s*s+s)
    b_comb = jnp.concatenate(
        [bxi.astype(jnp.float32), brou.astype(jnp.float32)]).reshape(1, s * s + s)

    # Constant sum-selection matrix S[k, i] = (k // s == i), shape (s*s, s).
    k = jnp.arange(s * s)
    sum_mat = (k[:, None] // s == jnp.arange(s)[None, :]).astype(jnp.float32)

    # Batch tiling: block must be a multiple of 8 sublanes; pad ragged N.
    block_n = _round_up(min(tile_n, _round_up(N, 8)), 8)
    n_blocks = pl.cdiv(N, block_n)
    n_pad = n_blocks * block_n
    if n_pad != N:
        pad = n_pad - N
        X = jnp.pad(X, ((0, pad), (0, 0)))
        H = jnp.pad(H, ((0, pad), (0, 0)))
        dg = jnp.pad(dg, ((0, pad),), constant_values=1.0)

    kernel = partial(hw_kernel, s=s, mu=mu)
    out = pl.pallas_call(
        kernel,
        out_shape=jax.ShapeDtypeStruct((n_pad, s), jnp.float32),
        grid_spec=pltpu.PrefetchScalarGridSpec(
            num_scalar_prefetch=0,
            grid=(n_blocks,),
            in_specs=[
                pl.BlockSpec((block_n, 2 * ln), lambda i: (i, 0)),     # X tile
                pl.BlockSpec((block_n, s), lambda i: (i, 0)),          # H tile
                pl.BlockSpec((block_n, 1), lambda i: (i, 0)),          # dg tile
                pl.BlockSpec((2 * ln, s * s + s), lambda i: (0, 0)),   # W_comb (resident)
                pl.BlockSpec((1, s * s + s), lambda i: (0, 0)),        # b_comb (resident)
                pl.BlockSpec((s * s, s), lambda i: (0, 0)),            # sum_mat (resident)
            ],
            out_specs=pl.BlockSpec((block_n, s), lambda i: (i, 0)),
        ),
        compiler_params=pltpu.CompilerParams(
            dimension_semantics=("parallel",),
            vmem_limit_bytes=32 * 1024 * 1024,
        ),
    )(X, H, dg.reshape(n_pad, 1), w_comb, b_comb, sum_mat)

    return out[:N]


def init_params(key, ln, s):
    """Deterministic synthetic parameters (weights stored as (in, out))."""
    k1, k2, k3, k4 = jax.random.split(key, 4)
    wxi = jax.random.normal(k1, (2 * ln, s * s), jnp.float32) * 0.1
    bxi = jax.random.normal(k2, (s * s,), jnp.float32) * 0.1
    wrou = jax.random.normal(k3, (ln, s), jnp.float32) * 0.1
    brou = jax.random.normal(k4, (s,), jnp.float32) * 0.1
    return wxi, bxi, wrou, brou


def hw_reference(X, H, dg, params, *, ln, s, mu=0.9):
    """Pure-JAX reference matching the PyTorch forward."""
    wxi, bxi, wrou, brou = params
    N = X.shape[0]
    A = (jnp.tanh(X @ wxi + bxi) * mu / s / dg[:, None]).reshape(N, s, s)
    b = jnp.tanh(X[:, :ln] @ wrou + brou)
    return jnp.einsum("nij,nj->ni", A, H) + b


if __name__ == "__main__":
    ln, s, mu = 16, 8, 0.9
    N = 40                      # not a multiple of the tile -> exercises padding

    key = jax.random.PRNGKey(0)
    kx, kh, kd, kp = jax.random.split(key, 4)

    X = jax.random.normal(kx, (N, 2 * ln), jnp.float32)
    H = jax.random.normal(kh, (N, s), jnp.float32)
    dg = jax.random.uniform(kd, (N,), jnp.float32, minval=1.0, maxval=5.0)
    params = init_params(kp, ln, s)

    # Small tile so the test exercises a multi-step pipelined batch grid.
    out = hw_forward(X, H, dg, params, ln=ln, s=s, mu=mu, tile_n=16)
    out = jax.block_until_ready(out)

    ref = hw_reference(X, H, dg, params, ln=ln, s=s, mu=mu)
    assert out.shape == (N, s)
    assert jnp.allclose(out, ref, atol=1e-5, rtol=1e-5), (
        f"max abs err {jnp.max(jnp.abs(out - ref))}"
    )
    print("KERNEL_OK")
</pallas_src>

<mosaic_0001>
module attributes {stable_mosaic.version = 11 : i64} {
  func.func @hw_kernel(%arg0: i32, %arg1: memref<16x32xf32, #tpu.memory_space<vmem>>, %arg2: memref<16x8xf32, #tpu.memory_space<vmem>>, %arg3: memref<16x1xf32, #tpu.memory_space<vmem>>, %arg4: memref<32x72xf32, #tpu.memory_space<vmem>>, %arg5: memref<1x72xf32, #tpu.memory_space<vmem>>, %arg6: memref<64x8xf32, #tpu.memory_space<vmem>>, %arg7: memref<16x8xf32, #tpu.memory_space<vmem>>) attributes {dimension_semantics = [#tpu.dimension_semantics<parallel>], iteration_bounds = array<i64: 3>, scalar_prefetch = 0 : i64, scratch_operands = 0 : i64, tpu.core_type = #tpu.core_type<tc>, window_params = [{transform_indices = @transform_0, window_bounds = array<i64: 16, 32>}, {transform_indices = @transform_1, window_bounds = array<i64: 16, 8>}, {transform_indices = @transform_2, window_bounds = array<i64: 16, 1>}, {pipeline_mode = #tpu.pipeline_mode<synchronous>, transform_indices = @transform_3, window_bounds = array<i64: 32, 72>}, {pipeline_mode = #tpu.pipeline_mode<synchronous>, transform_indices = @transform_4, window_bounds = array<i64: 1, 72>}, {pipeline_mode = #tpu.pipeline_mode<synchronous>, transform_indices = @transform_5, window_bounds = array<i64: 64, 8>}, {transform_indices = @transform_6, window_bounds = array<i64: 16, 8>}]} {
    %c0 = arith.constant 0 : index
    %c0_0 = arith.constant 0 : index
    %0 = vector.load %arg1[%c0, %c0_0] : memref<16x32xf32, #tpu.memory_space<vmem>>, vector<16x32xf32>
    %c0_1 = arith.constant 0 : index
    %c0_2 = arith.constant 0 : index
    %1 = vector.load %arg4[%c0_1, %c0_2] : memref<32x72xf32, #tpu.memory_space<vmem>>, vector<32x72xf32>
    %cst = arith.constant dense<0.000000e+00> : vector<16x72xf32>
    %2 = tpu.matmul %0, %1, %cst {dimension_numbers = #tpu.dot_dimension_numbers<[1], [0], [0], [1], [0, 0, 1, 1], [], []>} : vector<16x32xf32>, vector<32x72xf32>, vector<16x72xf32> -> vector<16x72xf32>
    %c0_3 = arith.constant 0 : index
    %c0_4 = arith.constant 0 : index
    %3 = vector.load %arg5[%c0_3, %c0_4] : memref<1x72xf32, #tpu.memory_space<vmem>>, vector<1x72xf32>
    %4 = vector.broadcast %3 : vector<1x72xf32> to vector<16x72xf32>
    %5 = arith.addf %2, %4 : vector<16x72xf32>
    %6 = math.tanh %5 : vector<16x72xf32>
    %7 = vector.extract_strided_slice %6 {offsets = [0, 0], sizes = [16, 64], strides = [1, 1]} : vector<16x72xf32> to vector<16x64xf32>
    %8 = vector.extract_strided_slice %6 {offsets = [0, 64], sizes = [16, 8], strides = [1, 1]} : vector<16x72xf32> to vector<16x8xf32>
    %c0_5 = arith.constant 0 : index
    %c0_6 = arith.constant 0 : index
    %9 = vector.load %arg2[%c0_5, %c0_6] : memref<16x8xf32, #tpu.memory_space<vmem>>, vector<16x8xf32>
    %10 = tpu.concatenate %9, %9, %9, %9, %9, %9, %9, %9 in 1 : vector<16x8xf32>, vector<16x8xf32>, vector<16x8xf32>, vector<16x8xf32>, vector<16x8xf32>, vector<16x8xf32>, vector<16x8xf32>, vector<16x8xf32> -> vector<16x64xf32>
    %11 = arith.mulf %7, %10 : vector<16x64xf32>
    %c0_7 = arith.constant 0 : index
    %c0_8 = arith.constant 0 : index
    %12 = vector.load %arg6[%c0_7, %c0_8] : memref<64x8xf32, #tpu.memory_space<vmem>>, vector<64x8xf32>
    %cst_9 = arith.constant dense<0.000000e+00> : vector<16x8xf32>
    %13 = tpu.matmul %11, %12, %cst_9 {dimension_numbers = #tpu.dot_dimension_numbers<[1], [0], [0], [1], [0, 0, 1, 1], [], []>} : vector<16x64xf32>, vector<64x8xf32>, vector<16x8xf32> -> vector<16x8xf32>
    %c0_10 = arith.constant 0 : index
    %c0_11 = arith.constant 0 : index
    %14 = vector.load %arg3[%c0_10, %c0_11] : memref<16x1xf32, #tpu.memory_space<vmem>>, vector<16x1xf32>
    %15 = tpu.reciprocal %14 : vector<16x1xf32> -> vector<16x1xf32>
    %cst_12 = arith.constant 1.125000e-01 : f32
    %16 = vector.broadcast %cst_12 : f32 to vector<16x1xf32>
    %17 = arith.mulf %16, %15 : vector<16x1xf32>
    %18 = vector.broadcast %17 : vector<16x1xf32> to vector<16x8xf32>
    %19 = arith.mulf %13, %18 : vector<16x8xf32>
    %20 = arith.addf %19, %8 : vector<16x8xf32>
    %c0_13 = arith.constant 0 : index
    %c0_14 = arith.constant 0 : index
    %21 = vector.load %arg7[%c0_13, %c0_14] : memref<16x8xf32, #tpu.memory_space<vmem>>, vector<16x8xf32>
    tpu.vector_store %arg7[%c0_13, %c0_14], %20 {strides = array<i32>} : memref<16x8xf32, #tpu.memory_space<vmem>>, vector<16x8xf32>,
    return
  }
  func.func @transform_0(%arg0: i32) -> (i32, i32) {
    %c0_i32 = arith.constant 0 : i32
    %c0_i32_0 = arith.constant 0 : i32
    return %arg0, %c0_i32 : i32, i32
  }
  func.func @transform_1(%arg0: i32) -> (i32, i32) {
    %c0_i32 = arith.constant 0 : i32
    %c0_i32_0 = arith.constant 0 : i32
    return %arg0, %c0_i32 : i32, i32
  }
  func.func @transform_2(%arg0: i32) -> (i32, i32) {
    %c0_i32 = arith.constant 0 : i32
    %c0_i32_0 = arith.constant 0 : i32
    return %arg0, %c0_i32 : i32, i32
  }
  func.func @transform_3(%arg0: i32) -> (i32, i32) {
    %c0_i32 = arith.constant 0 : i32
    %c0_i32_0 = arith.constant 0 : i32
    %c0_i32_1 = arith.constant 0 : i32
    return %c0_i32, %c0_i32_0 : i32, i32
  }
  func.func @transform_4(%arg0: i32) -> (i32, i32) {
    %c0_i32 = arith.constant 0 : i32
    %c0_i32_0 = arith.constant 0 : i32
    %c0_i32_1 = arith.constant 0 : i32
    return %c0_i32, %c0_i32_0 : i32, i32
  }
  func.func @transform_5(%arg0: i32) -> (i32, i32) {
    %c0_i32 = arith.constant 0 : i32
    %c0_i32_0 = arith.constant 0 : i32
    %c0_i32_1 = arith.constant 0 : i32
    return %c0_i32, %c0_i32_0 : i32, i32
  }
  func.func @transform_6(%arg0: i32) -> (i32, i32) {
    %c0_i32 = arith.constant 0 : i32
    %c0_i32_0 = arith.constant 0 : i32
    return %arg0, %c0_i32 : i32, i32
  }
}

</mosaic_0001>

<llo_original>
// kernel: tpu_custom_call.1
$region0: #{tpu_custom_call.1}
  #allocation0 [shape = 'u32[]', space=smem, size = 0x4, offset = 0x4, fixed_abs, tag = 'smem constant byte address 0x4 - core index']
  #allocation1 [shape = 'u32[144,128]{1,0:T(1,128)}', space=vmem, size = 0x12000, scoped, tag = 'internal scratch']
  %s0 = inlined_call_operand.vmem [shape: f32[48,32], index: 0, kind: input, shape index: {}]
  %s1 = inlined_call_operand.vmem [shape: f32[48,8], index: 1, kind: input, shape index: {}]
  %s2 = inlined_call_operand.vmem [shape: f32[48,1], index: 2, kind: input, shape index: {}]
  %s3 = inlined_call_operand.vmem [shape: f32[32,72], index: 3, kind: input, shape index: {}]
  %s4 = inlined_call_operand.vmem [shape: f32[1,72], index: 4, kind: input, shape index: {}]
  %s5 = inlined_call_operand.vmem [shape: f32[64,8], index: 5, kind: input, shape index: {}]
  %s6 = inlined_call_operand.vmem [shape: f32[48,8], index: 6, kind: output, shape index: {}]
  %s7 = sld [smem:[#allocation0]]
  $region57: #{tpu_custom_call.1} parent=0
    _
  %s9 = ssub.s32 1, %s7
  %s10 = scalar_select 0, %s9, %s7
  loop: start=0, step=1, limit=5
  $region2: #{tpu_custom_call.1} parent=0 // loop_pre_header
    _
  $region3: #{tpu_custom_call.1} parent=0 // loop_header
    %s12 = sphi 0, %s16
    %p13 = scmp.ge.s32.totalorder %s12, 5
    %s22 = sphi 0, %s24
    %s25 = sphi 0, %s22
    %s26 = sphi 0, %s25
    %s42 = sphi 0, %s26
    %s48 = sphi 0, %s50
    %s51 = sphi 0, %s48
    %s52 = sphi 0, %s51
    %s68 = sphi 0, %s52
    %s74 = sphi 0, %s76
    %s77 = sphi 0, %s74
    %s78 = sphi 0, %s77
    %s94 = sphi 0, %s78
    %s98 = sphi 0, %s98
    %s100 = sphi 0, %s98
    %s101 = sphi 0, %s100
    %s115 = sphi 0, %s101
    %s119 = sphi 0, %s119
    %s121 = sphi 0, %s119
    %s122 = sphi 0, %s121
    %s136 = sphi 0, %s122
    %s140 = sphi 0, %s140
    %s142 = sphi 0, %s140
    %s143 = sphi 0, %s142
    %s157 = sphi 0, %s143
    %s163 = sphi 0, %s165
    %s166 = sphi 0, %s163
    %s167 = sphi 0, %s166
    %s183 = sphi 0, %s167
  $region4: #{tpu_custom_call.1} parent=0 // loop_header_branch
    %15 = sbr.rel (%p13) target = $region8
  $region5: #{tpu_custom_call.1} parent=0 // loop_body
    %s17 = ssub.s32 %s12, 1
    %s18 = ssub.s32 %s12, 2
    %s19 = sadd.s32 %s12, 1
    %s20 = ssub.s32 %s12, %s19
    %p21 = scmp.eq.s32.totalorder %s20, 0
    %s23 = sadd.s32 %s22, 1
    %s24 = scalar_select %p21, %s22, %s23
    %p27 = pneg %p21
    %p28 = scmp.eq.s32.totalorder %s12, 2
    %p29 = por %p27, %p28
    %p30 = scmp.ne.s32.totalorder %s22, %s25
    %p31 = scmp.eq.s32.totalorder %s12, 0
    %p32 = por %p30, %p31
    %p33 = scmp.ne.s32.totalorder %s22, %s25
    %p34 = scmp.eq.s32.totalorder %s17, 2
    %p35 = por %p33, %p34
    %p36 = scmp.ne.s32.totalorder %s25, %s26
    %p37 = scmp.eq.s32.totalorder %s17, 0
    %p38 = por %p36, %p37
    %p39 = scmp.ne.s32.totalorder %s25, %s26
    %p40 = scmp.eq.s32.totalorder %s18, 2
    %p41 = por %p39, %p40
    %p43 = scmp.ne.s32.totalorder %s26, %s42
    %p44 = scmp.eq.s32.totalorder %s18, 0
    %p45 = por %p43, %p44
    %s46 = ssub.s32 %s12, %s19
    %p47 = scmp.eq.s32.totalorder %s46, 0
    %s49 = sadd.s32 %s48, 1
    %s50 = scalar_select %p47, %s48, %s49
    %p53 = pneg %p47
    %p54 = scmp.eq.s32.totalorder %s12, 2
    %p55 = por %p53, %p54
    %p56 = scmp.ne.s32.totalorder %s48, %s51
    %p57 = scmp.eq.s32.totalorder %s12, 0
    %p58 = por %p56, %p57
    %p59 = scmp.ne.s32.totalorder %s48, %s51
    %p60 = scmp.eq.s32.totalorder %s17, 2
    %p61 = por %p59, %p60
    %p62 = scmp.ne.s32.totalorder %s51, %s52
    %p63 = scmp.eq.s32.totalorder %s17, 0
    %p64 = por %p62, %p63
    %p65 = scmp.ne.s32.totalorder %s51, %s52
    %p66 = scmp.eq.s32.totalorder %s18, 2
    %p67 = por %p65, %p66
    %p69 = scmp.ne.s32.totalorder %s52, %s68
    %p70 = scmp.eq.s32.totalorder %s18, 0
    %p71 = por %p69, %p70
    %s72 = ssub.s32 %s12, %s19
    %p73 = scmp.eq.s32.totalorder %s72, 0
    %s75 = sadd.s32 %s74, 1
    %s76 = scalar_select %p73, %s74, %s75
    %p79 = pneg %p73
    %p80 = scmp.eq.s32.totalorder %s12, 2
    %p81 = por %p79, %p80
    %p82 = scmp.ne.s32.totalorder %s74, %s77
    %p83 = scmp.eq.s32.totalorder %s12, 0
    %p84 = por %p82, %p83
    %p85 = scmp.ne.s32.totalorder %s74, %s77
    %p86 = scmp.eq.s32.totalorder %s17, 2
    %p87 = por %p85, %p86
    %p88 = scmp.ne.s32.totalorder %s77, %s78
    %p89 = scmp.eq.s32.totalorder %s17, 0
    %p90 = por %p88, %p89
    %p91 = scmp.ne.s32.totalorder %s77, %s78
    %p92 = scmp.eq.s32.totalorder %s18, 2
    %p93 = por %p91, %p92
    %p95 = scmp.ne.s32.totalorder %s78, %s94
    %p96 = scmp.eq.s32.totalorder %s18, 0
    %p97 = por %p95, %p96
    %s99 = sadd.s32 %s98, 1
    %p102 = scmp.eq.s32.totalorder %s12, 2
    %p103 = scmp.ne.s32.totalorder %s98, %s100
    %p104 = scmp.eq.s32.totalorder %s12, 0
    %p105 = por %p103, %p104
    %p106 = scmp.ne.s32.totalorder %s98, %s100
    %p107 = scmp.eq.s32.totalorder %s17, 2
    %p108 = por %p106, %p107
    %p109 = scmp.ne.s32.totalorder %s100, %s101
    %p110 = scmp.eq.s32.totalorder %s17, 0
    %p111 = por %p109, %p110
    %p112 = scmp.ne.s32.totalorder %s100, %s101
    %p113 = scmp.eq.s32.totalorder %s18, 2
    %p114 = por %p112, %p113
    %p116 = scmp.ne.s32.totalorder %s101, %s115
    %p117 = scmp.eq.s32.totalorder %s18, 0
    %p118 = por %p116, %p117
    %s120 = sadd.s32 %s119, 1
    %p123 = scmp.eq.s32.totalorder %s12, 2
    %p124 = scmp.ne.s32.totalorder %s119, %s121
    %p125 = scmp.eq.s32.totalorder %s12, 0
    %p126 = por %p124, %p125
    %p127 = scmp.ne.s32.totalorder %s119, %s121
    %p128 = scmp.eq.s32.totalorder %s17, 2
    %p129 = por %p127, %p128
    %p130 = scmp.ne.s32.totalorder %s121, %s122
    %p131 = scmp.eq.s32.totalorder %s17, 0
    %p132 = por %p130, %p131
    %p133 = scmp.ne.s32.totalorder %s121, %s122
    %p134 = scmp.eq.s32.totalorder %s18, 2
    %p135 = por %p133, %p134
    %p137 = scmp.ne.s32.totalorder %s122, %s136
    %p138 = scmp.eq.s32.totalorder %s18, 0
    %p139 = por %p137, %p138
    %s141 = sadd.s32 %s140, 1
    %p144 = scmp.eq.s32.totalorder %s12, 2
    %p145 = scmp.ne.s32.totalorder %s140, %s142
    %p146 = scmp.eq.s32.totalorder %s12, 0
    %p147 = por %p145, %p146
    %p148 = scmp.ne.s32.totalorder %s140, %s142
    %p149 = scmp.eq.s32.totalorder %s17, 2
    %p150 = por %p148, %p149
    %p151 = scmp.ne.s32.totalorder %s142, %s143
    %p152 = scmp.eq.s32.totalorder %s17, 0
    %p153 = por %p151, %p152
    %p154 = scmp.ne.s32.totalorder %s142, %s143
    %p155 = scmp.eq.s32.totalorder %s18, 2
    %p156 = por %p154, %p155
    %p158 = scmp.ne.s32.totalorder %s143, %s157
    %p159 = scmp.eq.s32.totalorder %s18, 0
    %p160 = por %p158, %p159
    %s161 = ssub.s32 %s12, %s19
    %p162 = scmp.eq.s32.totalorder %s161, 0
    %s164 = sadd.s32 %s163, 1
    %s165 = scalar_select %p162, %s163, %s164
    %p168 = pneg %p162
    %p169 = scmp.eq.s32.totalorder %s12, 2
    %p170 = por %p168, %p169
    %p171 = scmp.ne.s32.totalorder %s163, %s166
    %p172 = scmp.eq.s32.totalorder %s12, 0
    %p173 = por %p171, %p172
    %p174 = scmp.ne.s32.totalorder %s163, %s166
    %p175 = scmp.eq.s32.totalorder %s17, 2
    %p176 = por %p174, %p175
    %p177 = scmp.ne.s32.totalorder %s166, %s167
    %p178 = scmp.eq.s32.totalorder %s17, 0
    %p179 = por %p177, %p178
    %p180 = scmp.ne.s32.totalorder %s166, %s167
    %p181 = scmp.eq.s32.totalorder %s18, 2
    %p182 = por %p180, %p181
    %p184 = scmp.ne.s32.totalorder %s167, %s183
    %p185 = scmp.eq.s32.totalorder %s18, 0
    %p186 = por %p184, %p185
    %p187 = scmp.le.s32.totalorder 1, %s12
    %p188 = scmp.lt.s32.totalorder %s12, 4
    %p189 = pnand %p187, %p188
    %p190 = pneg %p189
    // Predicated region
    $region9: #{tpu_custom_call.1} parent=5 // pred_check
      _
    $region10: #{tpu_custom_call.1} parent=5 // pred_check_branch
      %192 = sbr.rel (%p189) target = $region12
    $region11: #{tpu_custom_call.1} parent=5 // pred_region
      %s193 = ssub.s32 %s12, 1
      // Predicated region
      $region13: #{tpu_custom_call.1} parent=11 // pred_check
        %p194 = pneg %p111
      $region14: #{tpu_custom_call.1} parent=11 // pred_check_branch
        %196 = sbr.rel (%p194) target = $region16
      $region15: #{tpu_custom_call.1} parent=11 // pred_region
        _
      $region16: #{tpu_custom_call.1} parent=11 // pred_fallthru
        _
      // Predicated region
      $region17: #{tpu_custom_call.1} parent=11 // pred_check
        %p197 = pneg %p132
      $region18: #{tpu_custom_call.1} parent=11 // pred_check_branch
        %199 = sbr.rel (%p197) target = $region20
      $region19: #{tpu_custom_call.1} parent=11 // pred_region
        _
      $region20: #{tpu_custom_call.1} parent=11 // pred_fallthru
        _
      // Predicated region
      $region21: #{tpu_custom_call.1} parent=11 // pred_check
        %p200 = pneg %p153
      $region22: #{tpu_custom_call.1} parent=11 // pred_check_branch
        %202 = sbr.rel (%p200) target = $region24
      $region23: #{tpu_custom_call.1} parent=11 // pred_region
        _
      $region24: #{tpu_custom_call.1} parent=11 // pred_fallthru
        _
    $region12: #{tpu_custom_call.1} parent=5 // pred_fallthru
      _
    %p203 = scmp.lt.s32.totalorder %s12, 3
    // Predicated region
    $region25: #{tpu_custom_call.1} parent=5 // pred_check
      %p204 = pneg %p203
    $region26: #{tpu_custom_call.1} parent=5 // pred_check_branch
      %206 = sbr.rel (%p204) target = $region28
    $region27: #{tpu_custom_call.1} parent=5 // pred_region
      // Predicated region
      $region29: #{tpu_custom_call.1} parent=27 // pred_check
        %p207 = pneg %p32
      $region30: #{tpu_custom_call.1} parent=27 // pred_check_branch
        %209 = sbr.rel (%p207) target = $region32
      $region31: #{tpu_custom_call.1} parent=27 // pred_region
        %s210 = smul.u32 2, %s12
        %p211 = scmp.lt.s32.totalorder %s210, 5
        %s212 = scalar_select %p211, %s210, 5
        %s213 = smul.addr %s212, 8
        %s214 = scalar_lea.vmem %s0, %s213
        %s215 = smul.u32 2, %s12
      $region32: #{tpu_custom_call.1} parent=27 // pred_fallthru
        _
      // Predicated region
      $region33: #{tpu_custom_call.1} parent=27 // pred_check
        %p216 = pneg %p58
      $region34: #{tpu_custom_call.1} parent=27 // pred_check_branch
        %218 = sbr.rel (%p216) target = $region36
      $region35: #{tpu_custom_call.1} parent=27 // pred_region
        %s219 = smul.u32 2, %s12
        %p220 = scmp.lt.s32.totalorder %s219, 5
        %s221 = scalar_select %p220, %s219, 5
        %s222 = smul.addr %s221, 8
        %s223 = scalar_lea.vmem %s1, %s222
        %s224 = smul.u32 2, %s12
      $region36: #{tpu_custom_call.1} parent=27 // pred_fallthru
        _
      // Predicated region
      $region37: #{tpu_custom_call.1} parent=27 // pred_check
        %p225 = pneg %p84
      $region38: #{tpu_custom_call.1} parent=27 // pred_check_branch
        %227 = sbr.rel (%p225) target = $region40
      $region39: #{tpu_custom_call.1} parent=27 // pred_region
        %s228 = smul.u32 2, %s12
        %p229 = scmp.lt.s32.totalorder %s228, 5
        %s230 = scalar_select %p229, %s228, 5
        %s231 = smul.addr %s230, 8
        %s232 = scalar_lea.vmem %s2, %s231
        %s233 = smul.u32 2, %s12
      $region40: #{tpu_custom_call.1} parent=27 // pred_fallthru
        _
    $region28: #{tpu_custom_call.1} parent=5 // pred_fallthru
      _
    %p234 = scmp.le.s32.totalorder 1, %s12
    %p235 = scmp.lt.s32.totalorder %s12, 4
    %p236 = pnand %p234, %p235
    %p237 = pneg %p236
    // Predicated region
    $region41: #{tpu_custom_call.1} parent=5 // pred_check
      _
    $region42: #{tpu_custom_call.1} parent=5 // pred_check_branch
      %239 = sbr.rel (%p236) target = $region44
    $region43: #{tpu_custom_call.1} parent=5 // pred_region
      %s240 = ssub.s32 %s12, 1
      %s241 = smul.u32 2, %s17
      %p242 = scmp.lt.s32.totalorder %s241, 5
      %s243 = scalar_select %p242, %s241, 5
      %s244 = smul.addr %s243, 8
      %s245 = scalar_lea.vmem %s0, %s244
      %p246 = pneg %p38
      %p247 = pneg %p35
      %s248 = smul.u32 2, %s17
      %p249 = scmp.lt.s32.totalorder %s248, 5
      %s250 = scalar_select %p249, %s248, 5
      %s251 = smul.addr %s250, 8
      %s252 = scalar_lea.vmem %s1, %s251
      %p253 = pneg %p64
      %p254 = pneg %p61
      %s255 = smul.u32 2, %s17
      %p256 = scmp.lt.s32.totalorder %s255, 5
      %s257 = scalar_select %p256, %s255, 5
      %s258 = smul.addr %s257, 8
      %s259 = scalar_lea.vmem %s2, %s258
      %p260 = pneg %p90
      %p261 = pneg %p87
      %p262 = pneg %p111
      %p263 = pneg %p108
      %p264 = pneg %p132
      %p265 = pneg %p129
      %p266 = pneg %p153
      %p267 = pneg %p150
      %p268 = pneg %p179
      %p269 = pneg %p176
      %s270 = smul.u32 2, %s17
      %p271 = scmp.lt.s32.totalorder %s270, 5
      %s272 = scalar_select %p271, %s270, 5
      %s273 = smul.addr %s272, 8
      %s274 = scalar_lea.vmem %s6, %s273
      %s275 = smul.u32 2, %s17
      %p276 = scmp.lt.s32.totalorder %s275, 5
      %s277 = scalar_select %p276, %s275, 5
      %s278 = smul.addr %s277, 8
      %s279 = scalar_lea.vmem %s0, %s278
      %s280 = smul.u32 2, %s17
      %s281 = smul.u32 2, %s17
      %p282 = scmp.lt.s32.totalorder %s281, 5
      %s283 = scalar_select %p282, %s281, 5
      %s284 = smul.addr %s283, 8
      %s285 = scalar_lea.vmem %s1, %s284
      %s286 = smul.u32 2, %s17
      %s287 = smul.u32 2, %s17
      %p288 = scmp.lt.s32.totalorder %s287, 5
      %s289 = scalar_select %p288, %s287, 5
      %s290 = smul.addr %s289, 8
      %s291 = scalar_lea.vmem %s2, %s290
      %s292 = smul.u32 2, %s17
      %s293 = smul.u32 2, %s17
      %p294 = scmp.lt.s32.totalorder %s293, 5
      %s295 = scalar_select %p294, %s293, 5
      %s296 = smul.addr %s295, 8
      %s297 = scalar_lea.vmem %s6, %s296
      %s298 = smul.u32 2, %s17
      %v299 = vld [vmem:[%s279] sm:$0xff]
      %v300 = vld [vmem:[%s279 + $0x8] sm:$0xff]
      %v301 = vld [vmem:[%s3] sm:$0xff]
      %v302 = vld [vmem:[%s3 + $0x8] sm:$0xff]
      %v303 = vld [vmem:[%s3 + $0x10] sm:$0xff]
      %v304 = vld [vmem:[%s3 + $0x18] sm:$0xff]
      %v305 = vld [vmem:[%s4] sm:$0x1]
      %v307 = vlaneseq
      %v308 = vshrl.u32 %v307, 7
      %v309 = vsub.s32 0, %v308
      %v310 = vrot.slane %v305, %v309
      %vm312 = vcmask 261120
      %v314 = vsel %vm312, %v299, 0
      %v317 = vsel %vm312, %v300, 0
      %319 = vmatprep.subr.mxu0 0.0
      %320 = vmatpush1.msra.mxu0 %v301
      %321 = vmatprep.subr.mxu0 0.0
      %322 = vmatpush1.msra.mxu0 %v302
      %323 = vmatprep.subr.mxu0 0.0
      %324 = vmatpush1.msra.mxu0 %v303
      %325 = vmatprep.subr.mxu0 0.0
      %326 = vmatpush1.msra.mxu0 %v304
      %327 = vmatprep.subr.mxu0 0.0
      %328 = vmatpush1.msra.mxu0 0.0
      %329 = vmatprep.subr.mxu0 0.0
      %330 = vmatpush1.msra.mxu0 0.0
      %331 = vmatprep.subr.mxu0 0.0
      %332 = vmatpush1.msra.mxu0 0.0
      %333 = vmatprep.subr.mxu0 0.0
      %334 = vmatpush1.msra.mxu0 0.0
      %335 = vmatprep.subr.mxu0 0.0
      %336 = vmatpush1.msra.mxu0 0.0
      %337 = vmatprep.subr.mxu0 0.0
      %338 = vmatpush1.msra.mxu0 0.0
      %339 = vmatprep.subr.mxu0 0.0
      %340 = vmatpush1.msra.mxu0 0.0
      %341 = vmatprep.subr.mxu0 0.0
      %342 = vmatpush1.msra.mxu0 0.0
      %343 = vmatprep.subr.mxu0 0.0
      %344 = vmatpush1.msra.mxu0 0.0
      %345 = vmatprep.subr.mxu0 0.0
      %346 = vmatpush1.msra.mxu0 0.0
      %347 = vmatprep.subr.mxu0 0.0
      %348 = vmatpush1.msra.mxu0 0.0
      %349 = vmatprep.subr.mxu0 0.0
      %350 = vmatpush1.msra.mxu0 0.0
      %351 = vmatprep.subr.mxu0 0.0
      %352 = vmatpush1.msra.mxu0 0.0
      %353 = vmatprep.subr.mxu0 0.0
      %354 = vmatpush1.msra.mxu0 0.0
      %355 = vmatprep.subr.mxu0 0.0
      %356 = vmatpush1.msra.mxu0 0.0
      %357 = vmatprep.subr.mxu0 0.0
      %358 = vmatpush1.msra.mxu0 0.0
      %359 = vmatprep.subr.mxu0 0.0
      %360 = vmatpush1.msra.mxu0 0.0
      %361 = vmatprep.subr.mxu0 0.0
      %362 = vmatpush1.msra.mxu0 0.0
      %363 = vmatprep.subr.mxu0 0.0
      %364 = vmatpush1.msra.mxu0 0.0
      %365 = vmatprep.subr.mxu0 0.0
      %366 = vmatpush1.msra.mxu0 0.0
      %367 = vmatprep.subr.mxu0 0.0
      %368 = vmatpush1.msra.mxu0 0.0
      %369 = vmatprep.subr.mxu0 0.0
      %370 = vmatpush1.msra.mxu0 0.0
      %371 = vmatprep.subr.mxu0 0.0
      %372 = vmatpush1.msra.mxu0 0.0
      %373 = vmatprep.subr.mxu0 0.0
      %374 = vmatpush1.msra.mxu0 0.0
      %375 = vmatprep.subr.mxu0 0.0
      %376 = vmatpush1.msra.mxu0 0.0
      %377 = vmatprep.subr.mxu0 0.0
      %378 = vmatpush1.msra.mxu0 0.0
      %379 = vmatprep.subr.mxu0 0.0
      %380 = vmatpush1.msra.mxu0 0.0
      %381 = vmatprep.subr.mxu0 0.0
      %382 = vmatpush1.msra.mxu0 0.0
      %383 = vmatprep.mubr.f32.mxu0 0.0
      %384 = vmatmul.mubr.f32.gmra.mrb[0].mxu0 %v314
      %v385 = vpop.f32.mrb[0].mxu0
      %v386 = vadd.f32 %v310, %v385
      %v387 = vpop.f32.mrb[0].mxu0
      %388 = vmatprep.mubr.f32.mxu0 0.0
      %389 = vmatmul.mubr.f32.gmra.mrb[0].mxu0 %v317
      %v390 = vpop.f32.mrb[0].mxu0
      %v391 = vadd.f32 %v310, %v390
      %v392 = vpop.f32.mrb[0].mxu0
      %393 = vdwg.mxu0
      %v394 = vtanh.pop %v386
      %v395 = vtanh.pop %v391
      %v396 = vld [vmem:[%s285] sm:$0xff]
      %v397 = vld [vmem:[%s285 + $0x8] sm:$0xff]
      %400 = vrot.lane.b32.xlu0 %v396, 8
      %v401 = vpop.permute.xlu0 %400
      %402 = vrot.lane.b32.xlu0 %v397, 8
      %v403 = vpop.permute.xlu0 %402
      %406 = vrot.lane.b32.xlu0 %v396, 16
      %v407 = vpop.permute.xlu0 %406
      %408 = vrot.lane.b32.xlu0 %v397, 16
      %v409 = vpop.permute.xlu0 %408
      %412 = vrot.lane.b32.xlu0 %v396, 24
      %v413 = vpop.permute.xlu0 %412
      %414 = vrot.lane.b32.xlu0 %v397, 24
      %v415 = vpop.permute.xlu0 %414
      %418 = vrot.lane.b32.xlu0 %v396, 32
      %v419 = vpop.permute.xlu0 %418
      %420 = vrot.lane.b32.xlu0 %v397, 32
      %v421 = vpop.permute.xlu0 %420
      %424 = vrot.lane.b32.xlu0 %v396, 40
      %v425 = vpop.permute.xlu0 %424
      %426 = vrot.lane.b32.xlu0 %v397, 40
      %v427 = vpop.permute.xlu0 %426
      %430 = vrot.lane.b32.xlu0 %v396, 48
      %v431 = vpop.permute.xlu0 %430
      %432 = vrot.lane.b32.xlu0 %v397, 48
      %v433 = vpop.permute.xlu0 %432
      %436 = vrot.lane.b32.xlu0 %v396, 56
      %v437 = vpop.permute.xlu0 %436
      %438 = vrot.lane.b32.xlu0 %v397, 56
      %v439 = vpop.permute.xlu0 %438
      %vm442 = vcmask 64512
      %v443 = vsel %vm442, %v396, %v401
      %v444 = vsel %vm442, %v397, %v403
      %vm445 = vcmask 130048
      %v446 = vsel %vm445, %v443, %v407
      %v447 = vsel %vm445, %v444, %v409
      %vm448 = vcmask 195584
      %v449 = vsel %vm448, %v446, %v413
      %v450 = vsel %vm448, %v447, %v415
      %v451 = vsel %vm312, %v449, %v419
      %v452 = vsel %vm312, %v450, %v421
      %vm453 = vcmask 326656
      %v454 = vsel %vm453, %v451, %v425
      %v455 = vsel %vm453, %v452, %v427
      %vm456 = vcmask 392192
      %v457 = vsel %vm456, %v454, %v431
      %v458 = vsel %vm456, %v455, %v433
      %vm459 = vcmask 457728
      %v460 = vsel %vm459, %v457, %v437
      %v461 = vsel %vm459, %v458, %v439
      %v462 = vmul.f32 %v394, %v460
      %v463 = vmul.f32 %v395, %v461
      %v464 = vld [vmem:[%s5] sm:$0xff]
      %v465 = vld [vmem:[%s5 + $0x8] sm:$0xff]
      %v466 = vld [vmem:[%s5 + $0x10] sm:$0xff]
      %v467 = vld [vmem:[%s5 + $0x18] sm:$0xff]
      %v468 = vld [vmem:[%s5 + $0x20] sm:$0xff]
      %v469 = vld [vmem:[%s5 + $0x28] sm:$0xff]
      %v470 = vld [vmem:[%s5 + $0x30] sm:$0xff]
      %v471 = vld [vmem:[%s5 + $0x38] sm:$0xff]
      %vm472 = vcmask 523264
      %v474 = vsel %vm472, %v462, 0
      %v477 = vsel %vm472, %v463, 0
      %479 = vmatprep.subr.mxu0 0.0
      %480 = vmatpush1.msra.mxu0 %v464
      %481 = vmatprep.subr.mxu0 0.0
      %482 = vmatpush1.msra.mxu0 %v465
      %483 = vmatprep.subr.mxu0 0.0
      %484 = vmatpush1.msra.mxu0 %v466
      %485 = vmatprep.subr.mxu0 0.0
      %486 = vmatpush1.msra.mxu0 %v467
      %487 = vmatprep.subr.mxu0 0.0
      %488 = vmatpush1.msra.mxu0 %v468
      %489 = vmatprep.subr.mxu0 0.0
      %490 = vmatpush1.msra.mxu0 %v469
      %491 = vmatprep.subr.mxu0 0.0
      %492 = vmatpush1.msra.mxu0 %v470
      %493 = vmatprep.subr.mxu0 0.0
      %494 = vmatpush1.msra.mxu0 %v471
      %495 = vmatprep.subr.mxu0 0.0
      %496 = vmatpush1.msra.mxu0 0.0
      %497 = vmatprep.subr.mxu0 0.0
      %498 = vmatpush1.msra.mxu0 0.0
      %499 = vmatprep.subr.mxu0 0.0
      %500 = vmatpush1.msra.mxu0 0.0
      %501 = vmatprep.subr.mxu0 0.0
      %502 = vmatpush1.msra.mxu0 0.0
      %503 = vmatprep.subr.mxu0 0.0
      %504 = vmatpush1.msra.mxu0 0.0
      %505 = vmatprep.subr.mxu0 0.0
      %506 = vmatpush1.msra.mxu0 0.0
      %507 = vmatprep.subr.mxu0 0.0
      %508 = vmatpush1.msra.mxu0 0.0
      %509 = vmatprep.subr.mxu0 0.0
      %510 = vmatpush1.msra.mxu0 0.0
      %511 = vmatprep.subr.mxu0 0.0
      %512 = vmatpush1.msra.mxu0 0.0
      %513 = vmatprep.subr.mxu0 0.0
      %514 = vmatpush1.msra.mxu0 0.0
      %515 = vmatprep.subr.mxu0 0.0
      %516 = vmatpush1.msra.mxu0 0.0
      %517 = vmatprep.subr.mxu0 0.0
      %518 = vmatpush1.msra.mxu0 0.0
      %519 = vmatprep.subr.mxu0 0.0
      %520 = vmatpush1.msra.mxu0 0.0
      %521 = vmatprep.subr.mxu0 0.0
      %522 = vmatpush1.msra.mxu0 0.0
      %523 = vmatprep.subr.mxu0 0.0
      %524 = vmatpush1.msra.mxu0 0.0
      %525 = vmatprep.subr.mxu0 0.0
      %526 = vmatpush1.msra.mxu0 0.0
      %527 = vmatprep.subr.mxu0 0.0
      %528 = vmatpush1.msra.mxu0 0.0
      %529 = vmatprep.subr.mxu0 0.0
      %530 = vmatpush1.msra.mxu0 0.0
      %531 = vmatprep.subr.mxu0 0.0
      %532 = vmatpush1.msra.mxu0 0.0
      %533 = vmatprep.subr.mxu0 0.0
      %534 = vmatpush1.msra.mxu0 0.0
      %535 = vmatprep.subr.mxu0 0.0
      %536 = vmatpush1.msra.mxu0 0.0
      %537 = vmatprep.subr.mxu0 0.0
      %538 = vmatpush1.msra.mxu0 0.0
      %539 = vmatprep.subr.mxu0 0.0
      %540 = vmatpush1.msra.mxu0 0.0
      %541 = vmatprep.subr.mxu0 0.0
      %542 = vmatpush1.msra.mxu0 0.0
      %543 = vmatprep.mubr.f32.mxu0 0.0
      %544 = vmatmul.mubr.f32.gmra.mrb[0].mxu0 %v474
      %v545 = vpop.f32.mrb[0].mxu0
      %v546 = vadd.f32 0.0, %v545
      %v547 = vpop.f32.mrb[0].mxu0
      %548 = vmatprep.mubr.f32.mxu0 0.0
      %549 = vmatmul.mubr.f32.gmra.mrb[0].mxu0 %v477
      %v550 = vpop.f32.mrb[0].mxu0
      %v551 = vadd.f32 0.0, %v550
      %v552 = vpop.f32.mrb[0].mxu0
      %553 = vdwg.mxu0
      %v554 = vld [vmem:[%s291] sm:$0xff]
      %v555 = vld [vmem:[%s291 + $0x8] sm:$0xff]
      %v556 = vrcp.pop %v554
      %v557 = vrcp.pop %v555
      %v558 = vmul.f32 %v556, 0.1125
      %v559 = vmul.f32 %v557, 0.1125
      %561 = vset.pattern.permute.xlu0 0
      %562 = vperm.xlu0 %561, %v558
      %v563 = vpop.permute.xlu0 %562
      %566 = vset.pattern.permute.xlu0 0
      %567 = vperm.xlu0 %566, %v559
      %v568 = vpop.permute.xlu0 %567
      %v570 = vmul.f32 %v546, %v563
      %v571 = vmul.f32 %v551, %v568
      %574 = vrot.lane.b32.xlu0 %v394, 64
      %v575 = vpop.permute.xlu0 %574
      %576 = vrot.lane.b32.xlu0 %v395, 64
      %v577 = vpop.permute.xlu0 %576
      %v580 = vadd.f32 %v570, %v575
      %v581 = vadd.f32 %v571, %v577
      %582 = vst.msk [vmem:[%s297] sm:$0xff] %vm442, %v580
      %583 = vst.msk [vmem:[%s297 + $0x8] sm:$0xff] %vm442, %v581
      %s584 = smul.u32 2, %s17
      %p585 = scmp.lt.s32.totalorder %s584, 5
      %s586 = scalar_select %p585, %s584, 5
      %s587 = smul.addr %s586, 8
      %s588 = scalar_lea.vmem %s6, %s587
      // Predicated region
      $region45: #{tpu_custom_call.1} parent=43 // pred_check
        %p589 = pneg %p176
      $region46: #{tpu_custom_call.1} parent=43 // pred_check_branch
        %591 = sbr.rel (%p589) target = $region48
      $region47: #{tpu_custom_call.1} parent=43 // pred_region
        %s592 = smul.u32 2, %s17
      $region48: #{tpu_custom_call.1} parent=43 // pred_fallthru
        _
    $region44: #{tpu_custom_call.1} parent=5 // pred_fallthru
      _
    %p593 = scmp.le.s32.totalorder 2, %s12
    // Predicated region
    $region49: #{tpu_custom_call.1} parent=5 // pred_check
      %p594 = pneg %p593
    $region50: #{tpu_custom_call.1} parent=5 // pred_check_branch
      %596 = sbr.rel (%p594) target = $region52
    $region51: #{tpu_custom_call.1} parent=5 // pred_region
      %s597 = ssub.s32 %s12, 2
      // Predicated region
      $region53: #{tpu_custom_call.1} parent=51 // pred_check
        %p598 = pneg %p182
      $region54: #{tpu_custom_call.1} parent=51 // pred_check_branch
        %600 = sbr.rel (%p598) target = $region56
      $region55: #{tpu_custom_call.1} parent=51 // pred_region
        %s601 = smul.u32 2, %s18
        %p602 = scmp.lt.s32.totalorder %s601, 5
        %s603 = scalar_select %p602, %s601, 5
        %s604 = smul.addr %s603, 8
        %s605 = scalar_lea.vmem %s6, %s604
      $region56: #{tpu_custom_call.1} parent=51 // pred_fallthru
        _
    $region52: #{tpu_custom_call.1} parent=5 // pred_fallthru
      _
  $region6: #{tpu_custom_call.1} parent=0 // loop_footer
    %s16 = sadd.s32 1, %s12
  $region7: #{tpu_custom_call.1} parent=0 // loop_footer_branch
    %11 = sbr.rel target = $region3
  $region8: #{tpu_custom_call.1} parent=0 // loop_exit
    _

</llo_original>
